<compile_context>
chip_gen: v5e
topology: v5e:2x2
jax: 0.10.0
libtpu: 0.0.40
codegen_flags: <defaults>
</compile_context>

<pallas_src>
import functools
import math

import jax
import jax.numpy as jnp
from jax.experimental import pallas as pl
from jax.experimental.pallas import tpu as pltpu


# --------------------------------------------------------------------------
# Kernel
# --------------------------------------------------------------------------
def _ce_kernel(logits_ref, labels_ref, loss_ref, cnt_ref, sum_ref, *,
               ignore_lb, thresh_val, hw, padded):
    # logits_ref : (1, C, TP)  input dtype (f32/bf16), up-cast in VMEM
    # labels_ref : (1, 1, TP)  int32
    # loss_ref   : (1, 1, TP)  f32  per-pixel loss (0 where ignored)
    # cnt_ref    : (1, 1, 1, 128) f32  per-tile count(loss > thresh)
    # sum_ref    : (1, 1, 1, 128) f32  per-tile sum(loss where > thresh)
    x = logits_ref[0].astype(jnp.float32)                      # (C, TP)
    lab = labels_ref[0]                                        # (1, TP)
    c, tp = x.shape

    # Numerically-stable logsumexp over the class (sublane) axis.
    m = jnp.max(x, axis=0, keepdims=True)                      # (1, TP)
    sum_exp = jnp.sum(jnp.exp(x - m), axis=0, keepdims=True)   # (1, TP)

    # Gather x[label] with a (C, 1) class-index column (no (C, TP) int iota).
    # NOTE: labels outside [0, C) that are not ignore_lb silently gather 0
    # (loss = logsumexp) instead of raising like PyTorch's NLL would.
    cls = jax.lax.broadcasted_iota(jnp.int32, (c, 1), 0)       # (C, 1)
    x_lab = jnp.sum(jnp.where(cls == lab, x, 0.0),
                    axis=0, keepdims=True)                     # (1, TP)

    valid = lab != ignore_lb
    loss = jnp.where(valid, m + jnp.log(sum_exp) - x_lab, 0.0)  # (1, TP)
    loss_ref[0] = loss

    # Fused OHEM threshold statistics (saves a second HBM pass over loss).
    # Ignored pixels (loss==0) are counted iff thresh_val < 0 — bug-for-bug
    # with the PyTorch reference.  Padding pixels are always excluded.
    gt = loss > thresh_val                                      # (1, TP) bool
    if padded:
        pix = pl.program_id(1) * tp + jax.lax.broadcasted_iota(
            jnp.int32, (1, tp), 1)
        gt = jnp.logical_and(gt, pix < hw)
    cnt = jnp.sum(gt.astype(jnp.float32), axis=1, keepdims=True)          # (1,1)
    s = jnp.sum(jnp.where(gt, loss, 0.0), axis=1, keepdims=True)          # (1,1)
    cnt_ref[0, 0] = jnp.broadcast_to(cnt, (1, 128))
    sum_ref[0, 0] = jnp.broadcast_to(s, (1, 128))


# --------------------------------------------------------------------------
# Tiling
# --------------------------------------------------------------------------
def _choose_tiling(hw, c, in_itemsize, *, max_tile_p, vmem_budget_bytes):
    """Return (tile_p, hw_pad): lane-dense tile and padded pixel count."""
    c_pad = max(8, ((c + 7) // 8) * 8)
    # Rough per-pixel VMEM cost of one grid step:
    bytes_per_px = (2 * c_pad * in_itemsize   # double-buffered logits block
                    + 2 * 8 * 4               # double-buffered labels (int32)
                    + 2 * 8 * 4               # double-buffered loss (f32)
                    + 3 * c_pad * 4)          # in-kernel f32 temporaries
    cap = (vmem_budget_bytes // bytes_per_px) // 128 * 128
    cap = max(128, min((max_tile_p // 128) * 128, cap))

    if hw <= cap:                             # one tile per image row
        t = ((hw + 127) // 128) * 128
        return t, t

    # Prefer a large exact 128-multiple divisor (no padding pass over HBM).
    if hw % 128 == 0:
        lo = max(1024, cap // 8)
        for t in range(cap, lo - 1, -128):
            if hw % t == 0:
                return t, hw

    # Otherwise pad pixels up to a multiple of the largest tile (never a
    # single giant block — that would blow past physical VMEM).
    return cap, ((hw + cap - 1) // cap) * cap


# --------------------------------------------------------------------------
# pallas_call wrapper: per-pixel loss + fused threshold statistics
# --------------------------------------------------------------------------
def per_pixel_ce_stats(logits_nchw, labels_nhw, *, ignore_lb, thresh_val,
                       max_tile_p=32768,
                       vmem_budget_bytes=24 * 1024 * 1024,
                       vmem_limit_bytes=48 * 1024 * 1024):
    """Returns (loss_flat, cnt, sum_gt).

    loss_flat : (N*HW_pad,) f32 per-pixel CE (0 where ignored / padded)
    cnt       : ()  int32  number of pixels with loss > thresh_val
    sum_gt    : ()  f32    sum of losses > thresh_val
    """
    N, C, H, W = logits_nchw.shape
    HW = H * W
    itemsize = jnp.dtype(logits_nchw.dtype).itemsize
    tile_p, hw_pad = _choose_tiling(HW, C, itemsize,
                                    max_tile_p=max_tile_p,
                                    vmem_budget_bytes=vmem_budget_bytes)
    n_tiles = hw_pad // tile_p
    padded = hw_pad != HW

    # Free reshapes — no transpose pass over HBM.
    x = logits_nchw.reshape(N, C, HW)
    lab = labels_nhw.reshape(N, 1, HW).astype(jnp.int32)
    if padded:
        pad = hw_pad - HW
        x = jnp.pad(x, ((0, 0), (0, 0), (0, pad)))
        lab = jnp.pad(lab, ((0, 0), (0, 0), (0, pad)),
                      constant_values=ignore_lb)

    kernel = functools.partial(_ce_kernel, ignore_lb=ignore_lb,
                               thresh_val=thresh_val, hw=HW, padded=padded)

    cost = pl.CostEstimate(
        flops=7 * C * N * hw_pad,
        transcendentals=(C + 1) * N * hw_pad,
        bytes_accessed=(x.size * itemsize          # logits read
                        + lab.size * 4             # labels read
                        + N * hw_pad * 4           # loss write
                        + 2 * N * n_tiles * 128 * 4),
    )

    loss, cnt_p, sum_p = pl.pallas_call(
        kernel,
        out_shape=(
            jax.ShapeDtypeStruct((N, 1, hw_pad), jnp.float32),
            jax.ShapeDtypeStruct((N, n_tiles, 1, 128), jnp.float32),
            jax.ShapeDtypeStruct((N, n_tiles, 1, 128), jnp.float32),
        ),
        grid_spec=pltpu.PrefetchScalarGridSpec(
            num_scalar_prefetch=0,
            grid=(N, n_tiles),
            in_specs=[
                pl.BlockSpec((1, C, tile_p), lambda n, i: (n, 0, i)),
                pl.BlockSpec((1, 1, tile_p), lambda n, i: (n, 0, i)),
            ],
            out_specs=[
                pl.BlockSpec((1, 1, tile_p), lambda n, i: (n, 0, i)),
                pl.BlockSpec((1, 1, 1, 128), lambda n, i: (n, i, 0, 0)),
                pl.BlockSpec((1, 1, 1, 128), lambda n, i: (n, i, 0, 0)),
            ],
        ),
        compiler_params=pltpu.CompilerParams(
            dimension_semantics=("parallel", "parallel"),
            vmem_limit_bytes=vmem_limit_bytes),
        cost_estimate=cost,
    )(x, lab)

    # Per-tile counts are <= tile_p <= 32768, so exact in f32; sum in int32
    # so the total stays exact for multi-million-pixel batches.
    cnt = jnp.sum(cnt_p[:, :, 0, 0].astype(jnp.int32))
    sum_gt = jnp.sum(sum_p[:, :, 0, 0])
    return loss.reshape(-1), cnt, sum_gt


# --------------------------------------------------------------------------
# OHEM forward pass
# --------------------------------------------------------------------------
def ohem_cross_entropy_2d(logits, labels, *, thresh, n_min, ignore_lb=255):
    """Forward pass of OhemCrossEntropy2d."""
    thresh_val = float(-math.log(float(thresh)))

    loss, cnt, sum_gt = per_pixel_ce_stats(
        logits, labels, ignore_lb=ignore_lb, thresh_val=thresh_val)

    # loss_sorted[n_min] > thresh  <=>  count(loss > thresh) > n_min
    cond = cnt > n_min

    # Guard degenerate tiny inputs (PyTorch would index-error on them).
    k = max(1, min(int(n_min), int(loss.shape[0])))

    def _mean_over_thresh(_):
        return sum_gt / jnp.maximum(cnt.astype(jnp.float32), 1.0)

    def _mean_topk(_):
        # TODO(synk): top-k / sort has no clean Pallas TPU equivalent; plain
        # JAX here, but it only executes in this rare fallback branch.
        topk = jax.lax.top_k(loss, k)[0]
        return jnp.mean(topk)

    return jax.lax.cond(cond, _mean_over_thresh, _mean_topk, None)


# --------------------------------------------------------------------------
# Pure-JAX reference (mirrors the PyTorch module, sort-based)
# --------------------------------------------------------------------------
def _reference(logits, labels, *, thresh, n_min, ignore_lb=255):
    N, C, H, W = logits.shape
    x = jnp.transpose(logits, (0, 2, 3, 1)).reshape(-1, C)
    lab = labels.reshape(-1)
    logp = jax.nn.log_softmax(x.astype(jnp.float32), axis=-1)
    safe_lab = jnp.where(lab == ignore_lb, 0, lab)
    nll = -jnp.take_along_axis(logp, safe_lab[:, None], axis=-1)[:, 0]
    loss = jnp.where(lab == ignore_lb, 0.0, nll)
    loss_sorted = jnp.sort(loss)[::-1]
    thresh_val = float(-math.log(float(thresh)))
    cond = loss_sorted[n_min] > thresh_val
    gt = loss_sorted > thresh_val
    mean_gt = jnp.sum(jnp.where(gt, loss_sorted, 0.0)) / jnp.maximum(
        jnp.sum(gt.astype(jnp.float32)), 1.0)
    mean_topk = jnp.mean(loss_sorted[:n_min])
    return jnp.where(cond, mean_gt, mean_topk)


if __name__ == "__main__":
    key = jax.random.PRNGKey(0)
    k1, k2, k3 = jax.random.split(key, 3)

    N, C, H, W = 2, 4, 16, 16
    thresh = 0.7
    n_min = 64
    ignore_lb = 255

    logits = jax.random.normal(k1, (N, C, H, W), dtype=jnp.float32) * 3.0
    labels = jax.random.randint(k2, (N, H, W), 0, C, dtype=jnp.int32)
    ignore_mask = jax.random.uniform(k3, (N, H, W)) < 0.1
    labels = jnp.where(ignore_mask, ignore_lb, labels)

    out = ohem_cross_entropy_2d(
        logits, labels, thresh=thresh, n_min=n_min, ignore_lb=ignore_lb)
    out = jax.block_until_ready(out)

    ref = _reference(
        logits, labels, thresh=thresh, n_min=n_min, ignore_lb=ignore_lb)
    ref = jax.block_until_ready(ref)

    assert jnp.allclose(out, ref, rtol=1e-5, atol=1e-5), (out, ref)
    print("KERNEL_OK")
</pallas_src>

<mosaic_0001>
module attributes {stable_mosaic.version = 11 : i64} {
  func.func @_ce_kernel(%arg0: i32, %arg1: i32, %arg2: memref<1x4x256xf32, #tpu.memory_space<vmem>>, %arg3: memref<1x1x256xi32, #tpu.memory_space<vmem>>, %arg4: memref<1x1x256xf32, #tpu.memory_space<vmem>>, %arg5: memref<1x1x1x128xf32, #tpu.memory_space<vmem>>, %arg6: memref<1x1x1x128xf32, #tpu.memory_space<vmem>>) attributes {dimension_semantics = [#tpu.dimension_semantics<parallel>, #tpu.dimension_semantics<parallel>], iteration_bounds = array<i64: 2, 1>, scalar_prefetch = 0 : i64, scratch_operands = 0 : i64, tpu.core_type = #tpu.core_type<tc>, window_params = [{transform_indices = @transform_0, window_bounds = array<i64: 1, 4, 256>}, {transform_indices = @transform_1, window_bounds = array<i64: 1, 1, 256>}, {transform_indices = @transform_2, window_bounds = array<i64: 1, 1, 256>}, {transform_indices = @transform_3, window_bounds = array<i64: 1, 1, 1, 128>}, {transform_indices = @transform_4, window_bounds = array<i64: 1, 1, 1, 128>}]} {
    %c0 = arith.constant 0 : index
    %c0_0 = arith.constant 0 : index
    %c0_1 = arith.constant 0 : index
    %0 = vector.load %arg2[%c0, %c0_0, %c0_1] : memref<1x4x256xf32, #tpu.memory_space<vmem>>, vector<1x4x256xf32>
    %1 = vector.shape_cast %0 : vector<1x4x256xf32> to vector<4x256xf32>
    %c0_2 = arith.constant 0 : index
    %c0_3 = arith.constant 0 : index
    %c0_4 = arith.constant 0 : index
    %2 = vector.load %arg3[%c0_2, %c0_3, %c0_4] : memref<1x1x256xi32, #tpu.memory_space<vmem>>, vector<1x1x256xi32>
    %3 = vector.shape_cast %2 : vector<1x1x256xi32> to vector<1x256xi32>
    %cst = arith.constant dense<0xFF800000> : vector<256xf32>
    %4 = vector.multi_reduction <maximumf>, %1, %cst [0] : vector<4x256xf32> to vector<256xf32>
    %5 = vector.shape_cast %4 : vector<256xf32> to vector<1x256xf32>
    %6 = vector.broadcast %5 : vector<1x256xf32> to vector<4x256xf32>
    %7 = arith.subf %1, %6 : vector<4x256xf32>
    %8 = math.exp %7 : vector<4x256xf32>
    %cst_5 = arith.constant dense<0.000000e+00> : vector<256xf32>
    %9 = vector.multi_reduction <add>, %8, %cst_5 [0] : vector<4x256xf32> to vector<256xf32>
    %10 = vector.shape_cast %9 : vector<256xf32> to vector<1x256xf32>
    %11 = tpu.iota {dimensions = array<i32: 0>} : vector<4x1xi32>
    %12 = vector.broadcast %11 : vector<4x1xi32> to vector<4x256xi32>
    %13 = vector.broadcast %3 : vector<1x256xi32> to vector<4x256xi32>
    %14 = arith.cmpi eq, %12, %13 : vector<4x256xi32>
    %cst_6 = arith.constant 0.000000e+00 : f32
    %15 = vector.broadcast %cst_6 : f32 to vector<4x256xf32>
    %16 = arith.select %14, %1, %15 : vector<4x256xi1>, vector<4x256xf32>
    %cst_7 = arith.constant dense<0.000000e+00> : vector<256xf32>
    %17 = vector.multi_reduction <add>, %16, %cst_7 [0] : vector<4x256xf32> to vector<256xf32>
    %18 = vector.shape_cast %17 : vector<256xf32> to vector<1x256xf32>
    %c255_i32 = arith.constant 255 : i32
    %19 = vector.broadcast %c255_i32 : i32 to vector<1x256xi32>
    %20 = arith.cmpi ne, %3, %19 : vector<1x256xi32>
    %21 = math.log %10 : vector<1x256xf32>
    %22 = arith.addf %5, %21 : vector<1x256xf32>
    %23 = arith.subf %22, %18 : vector<1x256xf32>
    %cst_8 = arith.constant 0.000000e+00 : f32
    %24 = vector.broadcast %cst_8 : f32 to vector<1x256xf32>
    %25 = arith.select %20, %23, %24 : vector<1x256xi1>, vector<1x256xf32>
    %c0_9 = arith.constant 0 : index
    %c0_10 = arith.constant 0 : index
    %c0_11 = arith.constant 0 : index
    %26 = vector.load %arg4[%c0_9, %c0_10, %c0_11] : memref<1x1x256xf32, #tpu.memory_space<vmem>>, vector<1x1x256xf32>
    %27 = vector.shape_cast %26 : vector<1x1x256xf32> to vector<1x256xf32>
    %28 = vector.shape_cast %25 : vector<1x256xf32> to vector<1x1x256xf32>
    tpu.vector_store %arg4[%c0_9, %c0_10, %c0_11], %28 {strides = array<i32>} : memref<1x1x256xf32, #tpu.memory_space<vmem>>, vector<1x1x256xf32>,
    %cst_12 = arith.constant 0.356674939 : f32
    %29 = vector.broadcast %cst_12 : f32 to vector<1x256xf32>
    %30 = arith.cmpf ogt, %25, %29 : vector<1x256xf32>
    %31 = arith.extui %30 : vector<1x256xi1> to vector<1x256xi32>
    %32 = arith.sitofp %31 : vector<1x256xi32> to vector<1x256xf32>
    %cst_13 = arith.constant dense<0.000000e+00> : vector<1xf32>
    %33 = vector.multi_reduction <add>, %32, %cst_13 [1] : vector<1x256xf32> to vector<1xf32>
    %34 = vector.shape_cast %33 : vector<1xf32> to vector<1x1xf32>
    %cst_14 = arith.constant 0.000000e+00 : f32
    %35 = vector.broadcast %cst_14 : f32 to vector<1x256xf32>
    %36 = arith.select %30, %25, %35 : vector<1x256xi1>, vector<1x256xf32>
    %cst_15 = arith.constant dense<0.000000e+00> : vector<1xf32>
    %37 = vector.multi_reduction <add>, %36, %cst_15 [1] : vector<1x256xf32> to vector<1xf32>
    %38 = vector.shape_cast %37 : vector<1xf32> to vector<1x1xf32>
    %39 = vector.shape_cast %34 : vector<1x1xf32> to vector<1x1xf32>
    %40 = vector.broadcast %39 : vector<1x1xf32> to vector<1x128xf32>
    %c0_16 = arith.constant 0 : index
    %c0_17 = arith.constant 0 : index
    %c0_18 = arith.constant 0 : index
    %c0_19 = arith.constant 0 : index
    %41 = vector.load %arg5[%c0_16, %c0_17, %c0_18, %c0_19] : memref<1x1x1x128xf32, #tpu.memory_space<vmem>>, vector<1x1x1x128xf32>
    %42 = vector.shape_cast %41 : vector<1x1x1x128xf32> to vector<1x128xf32>
    %43 = vector.shape_cast %40 : vector<1x128xf32> to vector<1x1x1x128xf32>
    tpu.vector_store %arg5[%c0_16, %c0_17, %c0_18, %c0_19], %43 {strides = array<i32>} : memref<1x1x1x128xf32, #tpu.memory_space<vmem>>, vector<1x1x1x128xf32>,
    %44 = vector.shape_cast %38 : vector<1x1xf32> to vector<1x1xf32>
    %45 = vector.broadcast %44 : vector<1x1xf32> to vector<1x128xf32>
    %c0_20 = arith.constant 0 : index
    %c0_21 = arith.constant 0 : index
    %c0_22 = arith.constant 0 : index
    %c0_23 = arith.constant 0 : index
    %46 = vector.load %arg6[%c0_20, %c0_21, %c0_22, %c0_23] : memref<1x1x1x128xf32, #tpu.memory_space<vmem>>, vector<1x1x1x128xf32>
    %47 = vector.shape_cast %46 : vector<1x1x1x128xf32> to vector<1x128xf32>
    %48 = vector.shape_cast %45 : vector<1x128xf32> to vector<1x1x1x128xf32>
    tpu.vector_store %arg6[%c0_20, %c0_21, %c0_22, %c0_23], %48 {strides = array<i32>} : memref<1x1x1x128xf32, #tpu.memory_space<vmem>>, vector<1x1x1x128xf32>,
    return
  }
  func.func @transform_0(%arg0: i32, %arg1: i32) -> (i32, i32, i32) {
    %c0_i32 = arith.constant 0 : i32
    %c0_i32_0 = arith.constant 0 : i32
    return %arg0, %c0_i32, %arg1 : i32, i32, i32
  }
  func.func @transform_1(%arg0: i32, %arg1: i32) -> (i32, i32, i32) {
    %c0_i32 = arith.constant 0 : i32
    %c0_i32_0 = arith.constant 0 : i32
    return %arg0, %c0_i32, %arg1 : i32, i32, i32
  }
  func.func @transform_2(%arg0: i32, %arg1: i32) -> (i32, i32, i32) {
    %c0_i32 = arith.constant 0 : i32
    %c0_i32_0 = arith.constant 0 : i32
    return %arg0, %c0_i32, %arg1 : i32, i32, i32
  }
  func.func @transform_3(%arg0: i32, %arg1: i32) -> (i32, i32, i32, i32) {
    %c0_i32 = arith.constant 0 : i32
    %c0_i32_0 = arith.constant 0 : i32
    %c0_i32_1 = arith.constant 0 : i32
    return %arg0, %arg1, %c0_i32, %c0_i32_0 : i32, i32, i32, i32
  }
  func.func @transform_4(%arg0: i32, %arg1: i32) -> (i32, i32, i32, i32) {
    %c0_i32 = arith.constant 0 : i32
    %c0_i32_0 = arith.constant 0 : i32
    %c0_i32_1 = arith.constant 0 : i32
    return %arg0, %arg1, %c0_i32, %c0_i32_0 : i32, i32, i32, i32
  }
}

</mosaic_0001>

<llo_original>
// kernel: tpu_custom_call.1
$region0: #{tpu_custom_call.1}
  #allocation0 [shape = 'u32[]', space=smem, size = 0x4, offset = 0x4, fixed_abs, tag = 'smem constant byte address 0x4 - core index']
  #allocation1 [shape = 'u32[72,128]{1,0:T(1,128)}', space=vmem, size = 0x9000, scoped, tag = 'internal scratch']
  %s0 = inlined_call_operand.hbm [shape: f32[2,4,256], index: 0, kind: input, shape index: {}]
  %s1 = inlined_call_operand.hbm [shape: s32[2,1,256], index: 1, kind: input, shape index: {}]
  %s2 = inlined_call_operand.hbm [shape: f32[2,1,256], index: 2, kind: output, shape index: {0}]
  %s3 = inlined_call_operand.hbm [shape: f32[2,1,1,128], index: 3, kind: output, shape index: {1}]
  %s4 = inlined_call_operand.hbm [shape: f32[2,1,1,128], index: 4, kind: output, shape index: {2}]
  %5 = xla_tuple %s2, %s3, %s4
  %s6 = sld [smem:[#allocation0]]
  $region65: #{tpu_custom_call.1} parent=0
    _
  %s8 = ssub.s32 1, %s6
  %s9 = scalar_select 0, %s8, %s6
  $region1: #{tpu_custom_call.1} parent=0
    #allocation2 [shape = 'u8[8192]{0}', space=vmem, size = 0x2000, scoped, tag = 'input window, operand 0']
    #allocation3 [shape = 's32[2]{0}', space=sflag, size = 0x8, scoped, tag = 'scoped memory for tpu_custom_call.1']
    #allocation4 [shape = 's32[2]{0}', space=sflag, size = 0x8, scoped, tag = 'scoped memory for tpu_custom_call.1']
    #allocation5 [shape = 'u8[2048]{0}', space=vmem, size = 0x800, scoped, tag = 'input window, operand 1']
    #allocation6 [shape = 's32[2]{0}', space=sflag, size = 0x8, scoped, tag = 'scoped memory for tpu_custom_call.1']
    #allocation7 [shape = 'u8[2048]{0}', space=vmem, size = 0x800, scoped, tag = 'output window, operand 0']
    #allocation8 [shape = 'u8[1024]{0}', space=vmem, size = 0x400, scoped, tag = 'output window, operand 1']
    #allocation9 [shape = 's32[2]{0}', space=sflag, size = 0x8, scoped, tag = 'scoped memory for tpu_custom_call.1']
    #allocation10 [shape = 'u8[1024]{0}', space=vmem, size = 0x400, scoped, tag = 'output window, operand 2']
    %10 = vsyncpa [#allocation3], 0
    %s11 = scalar_lea.sflag [#allocation3], 1
    %12 = vsyncpa %s11, 0
    %13 = vsyncpa [#allocation6], 0
    %s14 = scalar_lea.sflag [#allocation6], 1
    %15 = vsyncpa %s14, 0
    %16 = vsyncpa [#allocation4], 0
    %s17 = scalar_lea.sflag [#allocation4], 1
    %18 = vsyncpa %s17, 0
    %19 = vsyncpa [#allocation9], 0
    %s20 = scalar_lea.sflag [#allocation9], 1
    %21 = vsyncpa %s20, 0
    loop: start=0, step=1, limit=4
    $region2: #{tpu_custom_call.1} parent=1 // loop_pre_header
      _
    $region3: #{tpu_custom_call.1} parent=1 // loop_header
      %s23 = sphi 0, %s27
      %p24 = scmp.ge.s32.totalorder %s23, 4
      %s30 = sphi 0, %s42
      %s31 = sphi 0, %s38
      %s32 = sphi 0, %s30
      %s33 = sphi 0, %s31
      %s34 = sphi 0, %s32
      %s35 = sphi 0, %s33
      %s47 = sphi 0, %s49
      %s50 = sphi 0, %s47
      %s51 = sphi 0, %s50
      %s67 = sphi 0, %s51
      %s75 = sphi 0, %s77
      %s78 = sphi 0, %s75
      %s79 = sphi 0, %s78
      %s95 = sphi 0, %s79
      %s103 = sphi 0, %s105
      %s106 = sphi 0, %s103
      %s107 = sphi 0, %s106
      %s123 = sphi 0, %s107
      %s131 = sphi 0, %s133
      %s134 = sphi 0, %s131
      %s135 = sphi 0, %s134
      %s151 = sphi 0, %s135
      %s159 = sphi 0, %s161
      %s162 = sphi 0, %s159
      %s163 = sphi 0, %s162
      %s179 = sphi 0, %s163
    $region4: #{tpu_custom_call.1} parent=1 // loop_header_branch
      %26 = sbr.rel (%p24) target = $region8
    $region5: #{tpu_custom_call.1} parent=1 // loop_body
      %s28 = ssub.s32 %s23, 1
      %s29 = ssub.s32 %s23, 2
      %s36 = sadd.s32 1, %s31
      %p37 = scmp.ge.s32.totalorder %s36, 1
      %s38 = scalar_select %p37, 0, %s36
      %s39 = sadd.s32 1, %s30
      %s40 = scalar_select %p37, %s39, %s30
      %p41 = scmp.ge.s32.totalorder %s40, 2
      %s42 = scalar_select %p41, 0, %s40
      %s43 = ssub.s32 %s30, %s42
      %s44 = ssub.s32 %s31, %s38
      %s45 = sor.u32 %s43, %s44
      %p46 = scmp.eq.s32.totalorder %s45, 0
      %s48 = sadd.s32 %s47, 1
      %s49 = scalar_select %p46, %s47, %s48
      %p52 = pneg %p46
      %p53 = scmp.eq.s32.totalorder %s23, 1
      %p54 = por %p52, %p53
      %p55 = scmp.ne.s32.totalorder %s47, %s50
      %p56 = scmp.eq.s32.totalorder %s23, 0
      %p57 = por %p55, %p56
      %p58 = scmp.ne.s32.totalorder %s47, %s50
      %p59 = scmp.eq.s32.totalorder %s28, 1
      %p60 = por %p58, %p59
      %p61 = scmp.ne.s32.totalorder %s50, %s51
      %p62 = scmp.eq.s32.totalorder %s28, 0
      %p63 = por %p61, %p62
      %p64 = scmp.ne.s32.totalorder %s50, %s51
      %p65 = scmp.eq.s32.totalorder %s29, 1
      %p66 = por %p64, %p65
      %p68 = scmp.ne.s32.totalorder %s51, %s67
      %p69 = scmp.eq.s32.totalorder %s29, 0
      %p70 = por %p68, %p69
      %s71 = ssub.s32 %s30, %s42
      %s72 = ssub.s32 %s31, %s38
      %s73 = sor.u32 %s71, %s72
      %p74 = scmp.eq.s32.totalorder %s73, 0
      %s76 = sadd.s32 %s75, 1
      %s77 = scalar_select %p74, %s75, %s76
      %p80 = pneg %p74
      %p81 = scmp.eq.s32.totalorder %s23, 1
      %p82 = por %p80, %p81
      %p83 = scmp.ne.s32.totalorder %s75, %s78
      %p84 = scmp.eq.s32.totalorder %s23, 0
      %p85 = por %p83, %p84
      %p86 = scmp.ne.s32.totalorder %s75, %s78
      %p87 = scmp.eq.s32.totalorder %s28, 1
      %p88 = por %p86, %p87
      %p89 = scmp.ne.s32.totalorder %s78, %s79
      %p90 = scmp.eq.s32.totalorder %s28, 0
      %p91 = por %p89, %p90
      %p92 = scmp.ne.s32.totalorder %s78, %s79
      %p93 = scmp.eq.s32.totalorder %s29, 1
      %p94 = por %p92, %p93
      %p96 = scmp.ne.s32.totalorder %s79, %s95
      %p97 = scmp.eq.s32.totalorder %s29, 0
      %p98 = por %p96, %p97
      %s99 = ssub.s32 %s30, %s42
      %s100 = ssub.s32 %s31, %s38
      %s101 = sor.u32 %s99, %s100
      %p102 = scmp.eq.s32.totalorder %s101, 0
      %s104 = sadd.s32 %s103, 1
      %s105 = scalar_select %p102, %s103, %s104
      %p108 = pneg %p102
      %p109 = scmp.eq.s32.totalorder %s23, 1
      %p110 = por %p108, %p109
      %p111 = scmp.ne.s32.totalorder %s103, %s106
      %p112 = scmp.eq.s32.totalorder %s23, 0
      %p113 = por %p111, %p112
      %p114 = scmp.ne.s32.totalorder %s103, %s106
      %p115 = scmp.eq.s32.totalorder %s28, 1
      %p116 = por %p114, %p115
      %p117 = scmp.ne.s32.totalorder %s106, %s107
      %p118 = scmp.eq.s32.totalorder %s28, 0
      %p119 = por %p117, %p118
      %p120 = scmp.ne.s32.totalorder %s106, %s107
      %p121 = scmp.eq.s32.totalorder %s29, 1
      %p122 = por %p120, %p121
      %p124 = scmp.ne.s32.totalorder %s107, %s123
      %p125 = scmp.eq.s32.totalorder %s29, 0
      %p126 = por %p124, %p125
      %s127 = ssub.s32 %s30, %s42
      %s128 = ssub.s32 %s31, %s38
      %s129 = sor.u32 %s127, %s128
      %p130 = scmp.eq.s32.totalorder %s129, 0
      %s132 = sadd.s32 %s131, 1
      %s133 = scalar_select %p130, %s131, %s132
      %p136 = pneg %p130
      %p137 = scmp.eq.s32.totalorder %s23, 1
      %p138 = por %p136, %p137
      %p139 = scmp.ne.s32.totalorder %s131, %s134
      %p140 = scmp.eq.s32.totalorder %s23, 0
      %p141 = por %p139, %p140
      %p142 = scmp.ne.s32.totalorder %s131, %s134
      %p143 = scmp.eq.s32.totalorder %s28, 1
      %p144 = por %p142, %p143
      %p145 = scmp.ne.s32.totalorder %s134, %s135
      %p146 = scmp.eq.s32.totalorder %s28, 0
      %p147 = por %p145, %p146
      %p148 = scmp.ne.s32.totalorder %s134, %s135
      %p149 = scmp.eq.s32.totalorder %s29, 1
      %p150 = por %p148, %p149
      %p152 = scmp.ne.s32.totalorder %s135, %s151
      %p153 = scmp.eq.s32.totalorder %s29, 0
      %p154 = por %p152, %p153
      %s155 = ssub.s32 %s30, %s42
      %s156 = ssub.s32 %s31, %s38
      %s157 = sor.u32 %s155, %s156
      %p158 = scmp.eq.s32.totalorder %s157, 0
      %s160 = sadd.s32 %s159, 1
      %s161 = scalar_select %p158, %s159, %s160
      %p164 = pneg %p158
      %p165 = scmp.eq.s32.totalorder %s23, 1
      %p166 = por %p164, %p165
      %p167 = scmp.ne.s32.totalorder %s159, %s162
      %p168 = scmp.eq.s32.totalorder %s23, 0
      %p169 = por %p167, %p168
      %p170 = scmp.ne.s32.totalorder %s159, %s162
      %p171 = scmp.eq.s32.totalorder %s28, 1
      %p172 = por %p170, %p171
      %p173 = scmp.ne.s32.totalorder %s162, %s163
      %p174 = scmp.eq.s32.totalorder %s28, 0
      %p175 = por %p173, %p174
      %p176 = scmp.ne.s32.totalorder %s162, %s163
      %p177 = scmp.eq.s32.totalorder %s29, 1
      %p178 = por %p176, %p177
      %p180 = scmp.ne.s32.totalorder %s163, %s179
      %p181 = scmp.eq.s32.totalorder %s29, 0
      %p182 = por %p180, %p181
      %p183 = scmp.le.s32.totalorder 1, %s23
      %p184 = scmp.lt.s32.totalorder %s23, 3
      %p185 = pnand %p183, %p184
      %p186 = pneg %p185
      // Predicated region
      $region9: #{tpu_custom_call.1} parent=5 // pred_check
        _
      $region10: #{tpu_custom_call.1} parent=5 // pred_check_branch
        %188 = sbr.rel (%p185) target = $region12
      $region11: #{tpu_custom_call.1} parent=5 // pred_region
        %s189 = ssub.s32 %s23, 1
      $region12: #{tpu_custom_call.1} parent=5 // pred_fallthru
        _
      %p190 = scmp.lt.s32.totalorder %s23, 2
      // Predicated region
      $region13: #{tpu_custom_call.1} parent=5 // pred_check
        %p191 = pneg %p190
      $region14: #{tpu_custom_call.1} parent=5 // pred_check_branch
        %193 = sbr.rel (%p191) target = $region16
      $region15: #{tpu_custom_call.1} parent=5 // pred_region
        // Predicated region
        $region17: #{tpu_custom_call.1} parent=15 // pred_check
          %p194 = pneg %p57
        $region18: #{tpu_custom_call.1} parent=15 // pred_check_branch
          %196 = sbr.rel (%p194) target = $region20
        $region19: #{tpu_custom_call.1} parent=15 // pred_region
          %s197 = sand.u32 %s47, 1
          %s198 = scalar_lea.sflag [#allocation3], %s197
          %s199 = sand.u32 %s47, 1
          %s200 = smul.addr %s199, 8
          %s201 = scalar_lea.vmem [#allocation2], %s200
          %s202 = smul.u32 2, %s31
          %204 = vsyncadd %s198, 0
          %s205 = smul.addr %s30, 2
          %s206 = sadd.s32 %s202, %s205
          %s207 = smul.addr %s206, 4
          %s208 = scalar_lea.hbm %s0, %s207
          %s210 = sshll.u32 %s208, 4
          %s211 = int_to_ptr.hbm [resolvable:$true] %s210
          %s212 = sshll.u32 %s201, 4
          %s213 = int_to_ptr.vmem [resolvable:$true] %s212
          %215 = dma.hbm_to_vmem [thread:$0]  %s211, 128, %s213, %s198
        $region20: #{tpu_custom_call.1} parent=15 // pred_fallthru
          _
        // Predicated region
        $region21: #{tpu_custom_call.1} parent=15 // pred_check
          %p216 = pneg %p85
        $region22: #{tpu_custom_call.1} parent=15 // pred_check_branch
          %218 = sbr.rel (%p216) target = $region24
        $region23: #{tpu_custom_call.1} parent=15 // pred_region
          %s219 = sand.u32 %s75, 1
          %s220 = scalar_lea.sflag [#allocation6], %s219
          %s221 = sand.u32 %s75, 1
          %s222 = smul.addr %s221, 2
          %s223 = scalar_lea.vmem [#allocation5], %s222
          %s224 = smul.u32 2, %s31
          %226 = vsyncadd %s220, 0
          %s227 = smul.addr %s30, 2
          %s228 = sadd.s32 %s224, %s227
          %s229 = scalar_lea.hbm %s1, %s228
          %s231 = sshll.u32 %s229, 4
          %s232 = int_to_ptr.hbm [resolvable:$true] %s231
          %s233 = sshll.u32 %s223, 4
          %s234 = int_to_ptr.vmem [resolvable:$true] %s233
          %236 = dma.hbm_to_vmem [thread:$0]  %s232, 32, %s234, %s220
        $region24: #{tpu_custom_call.1} parent=15 // pred_fallthru
          _
      $region16: #{tpu_custom_call.1} parent=5 // pred_fallthru
        _
      %p237 = scmp.le.s32.totalorder 1, %s23
      %p238 = scmp.lt.s32.totalorder %s23, 3
      %p239 = pnand %p237, %p238
      %p240 = pneg %p239
      // Predicated region
      $region25: #{tpu_custom_call.1} parent=5 // pred_check
        _
      $region26: #{tpu_custom_call.1} parent=5 // pred_check_branch
        %242 = sbr.rel (%p239) target = $region28
      $region27: #{tpu_custom_call.1} parent=5 // pred_region
        %s243 = ssub.s32 %s23, 1
        %s244 = sand.u32 %s50, 1
        %s245 = scalar_lea.sflag [#allocation3], %s244
        %s246 = sand.u32 %s50, 1
        %s247 = smul.addr %s246, 8
        %s248 = scalar_lea.vmem [#allocation2], %s247
        // Predicated region
        $region29: #{tpu_custom_call.1} parent=27 // pred_check
          %p249 = pneg %p63
        $region30: #{tpu_custom_call.1} parent=27 // pred_check_branch
          %251 = sbr.rel (%p249) target = $region32
        $region31: #{tpu_custom_call.1} parent=27 // pred_region
          %253 = dma.done %s245, 128
        $region32: #{tpu_custom_call.1} parent=27 // pred_fallthru
          _
        %s254 = sand.u32 %s78, 1
        %s255 = scalar_lea.sflag [#allocation6], %s254
        %s256 = sand.u32 %s78, 1
        %s257 = smul.addr %s256, 2
        %s258 = scalar_lea.vmem [#allocation5], %s257
        // Predicated region
        $region33: #{tpu_custom_call.1} parent=27 // pred_check
          %p259 = pneg %p91
        $region34: #{tpu_custom_call.1} parent=27 // pred_check_branch
          %261 = sbr.rel (%p259) target = $region36
        $region35: #{tpu_custom_call.1} parent=27 // pred_region
          %263 = dma.done %s255, 32
        $region36: #{tpu_custom_call.1} parent=27 // pred_fallthru
          _
        %s264 = sand.u32 %s50, 1
        %s265 = scalar_lea.sflag [#allocation3], %s264
        %s266 = sand.u32 %s50, 1
        %s267 = smul.addr %s266, 8
        %s268 = scalar_lea.vmem [#allocation2], %s267
        %p269 = pneg %p63
        %p270 = pneg %p60
        %s271 = sand.u32 %s78, 1
        %s272 = scalar_lea.sflag [#allocation6], %s271
        %s273 = sand.u32 %s78, 1
        %s274 = smul.addr %s273, 2
        %s275 = scalar_lea.vmem [#allocation5], %s274
        %p276 = pneg %p91
        %p277 = pneg %p88
        %p278 = pneg %p119
        %p279 = pneg %p116
        %s280 = sand.u32 %s106, 1
        %s281 = scalar_lea.sflag [#allocation4], %s280
        %s282 = sand.u32 %s106, 1
        %s283 = smul.addr %s282, 2
        %s284 = scalar_lea.vmem [#allocation7], %s283
        %p285 = pneg %p147
        %p286 = pneg %p144
        %s287 = sand.u32 %s28, 1
        %s288 = scalar_lea.sflag [#allocation9], %s287
        %s289 = sand.u32 %s134, 1
        %s290 = scalar_lea.vmem [#allocation8], %s289
        %p291 = pneg %p175
        %p292 = pneg %p172
        %s293 = sand.u32 %s28, 1
        %s294 = scalar_lea.sflag [#allocation9], %s293
        %s295 = sand.u32 %s162, 1
        %s296 = scalar_lea.vmem [#allocation10], %s295
        %s297 = smul.u32 2, %s33
        %s298 = smul.u32 2, %s33
        %s299 = smul.u32 2, %s33
        %v300 = vld [vmem:[%s248] sm:$0xff]
        %v301 = vld [vmem:[%s258] sm:$0x3]
        %303 = vst [vmem:[#allocation1] ss:$2 sm:$0xff] %v300
        %v304 = vld.sshfl [vmem:[#allocation1] sm:$0xff pattern:$0x75316420]
        %v305 = vld.sshfl [vmem:[#allocation1 + $0x8] sm:$0xff pattern:$0x75316420]
        %vm308 = vcmask 1043456
        %v309 = vsel %vm308, %v304, -inf
        %v310 = vrot.slane %v309, 4
        %v311 = vmax.f32 %v309, %v310
        %v312 = vrot.slane %v311, 2
        %v313 = vmax.f32 %v311, %v312
        %v314 = vrot.slane %v313, 1
        %v315 = vmax.f32 %v313, %v314
        %v316 = vsel %vm308, %v305, -inf
        %v317 = vrot.slane %v316, 4
        %v318 = vmax.f32 %v316, %v317
        %v319 = vrot.slane %v318, 2
        %v320 = vmax.f32 %v318, %v319
        %v321 = vrot.slane %v320, 1
        %v322 = vmax.f32 %v320, %v321
        %v325 = vrot.slane %v322, 4
        %v326 = vsel %vm308, %v315, %v325
        %v328 = vsub.f32 %v300, %v326
        %v329 = vmul.f32 %v328, 1.442695
        %v330 = vpow.pop %v329
        %332 = vst [vmem:[#allocation1] ss:$2 sm:$0xff] %v330
        %v333 = vld.sshfl [vmem:[#allocation1] sm:$0xff pattern:$0x75316420]
        %v334 = vld.sshfl [vmem:[#allocation1 + $0x8] sm:$0xff pattern:$0x75316420]
        %v337 = vsel %vm308, %v333, 0.0
        %v338 = vrot.slane %v337, 4
        %v339 = vadd.f32 %v337, %v338
        %v340 = vrot.slane %v339, 2
        %v341 = vadd.f32 %v339, %v340
        %v342 = vrot.slane %v341, 1
        %v343 = vadd.f32 %v341, %v342
        %v344 = vsel %vm308, %v334, 0.0
        %v345 = vrot.slane %v344, 4
        %v346 = vadd.f32 %v344, %v345
        %v347 = vrot.slane %v346, 2
        %v348 = vadd.f32 %v346, %v347
        %v349 = vrot.slane %v348, 1
        %v350 = vadd.f32 %v348, %v349
        %v351 = vlaneseq
        %v352 = vshrl.u32 %v351, 7
        %v353 = vperm.slane %v301, 0
        %v354 = vperm.slane %v301, 1
        %vm355 = vcmp.eq.s32.totalorder %v352, %v353
        %vm356 = vcmp.eq.s32.totalorder %v352, %v354
        %357 = vst [vmem:[#allocation1] ss:$2 sm:$0xff] %v300
        %v358 = vld.sshfl [vmem:[#allocation1] sm:$0xff pattern:$0x75316420]
        %v359 = vld.sshfl [vmem:[#allocation1 + $0x8] sm:$0xff pattern:$0x75316420]
        %v362 = vsel %vm355, %v358, 0.0
        %v363 = vsel %vm356, %v359, 0.0
        %v364 = vsel %vm308, %v362, 0.0
        %v365 = vrot.slane %v364, 4
        %v366 = vadd.f32 %v364, %v365
        %v367 = vrot.slane %v366, 2
        %v368 = vadd.f32 %v366, %v367
        %v369 = vrot.slane %v368, 1
        %v370 = vadd.f32 %v368, %v369
        %v371 = vsel %vm308, %v363, 0.0
        %v372 = vrot.slane %v371, 4
        %v373 = vadd.f32 %v371, %v372
        %v374 = vrot.slane %v373, 2
        %v375 = vadd.f32 %v373, %v374
        %v376 = vrot.slane %v375, 1
        %v377 = vadd.f32 %v375, %v376
        %vm378 = vcmp.ne.s32.totalorder %v301, 255
        %v379 = vlog2.pop %v343
        %v380 = vmul.f32 %v379, 0.6931472
        %v381 = vlog2.pop %v350
        %v382 = vmul.f32 %v381, 0.6931472
        %v383 = vadd.f32 %v315, %v380
        %v384 = vadd.f32 %v322, %v382
        %v385 = vsub.f32 %v383, %v370
        %v386 = vsub.f32 %v384, %v377
        %v389 = vrot.slane %v386, 7
        %vm390 = vcmask 1040384
        %v391 = vsel %vm390, %v385, %v389
        %v393 = vsel %vm378, %v391, 0.0
        %v394 = vlaneseq
        %vm395 = vcmp.ge.s32.totalorder %v394, 0
        %vm396 = vcmp.lt.s32.totalorder %v394, 256
        %vm397 = vmand %vm395, %vm396
        %398 = vst.msk [vmem:[%s284] sm:$0x3] %vm397, %v393
        %vm399 = vcmp.gt.f32.partialorder %v393, 0.35667494
        %v400 = vsel %vm399, 1, 0
        %v401 = vcvt.s32.f32 %v400
        %v403 = vperm.slane %v401, 0
        %v404 = vperm.slane %v401, 1
        %v407 = vsel %vm390, %v403, 0.0
        %v408 = vsel %vm390, %v404, 0.0
        %v409 = vadd.f32 %v407, %v408
        %410 = vadd.xlane.f32.xlu0 %v409
        %v411 = vpop.xlane.xlu0 %410
        %v412 = vsel %vm399, %v393, 0.0
        %v414 = vperm.slane %v412, 0
        %v415 = vperm.slane %v412, 1
        %v418 = vsel %vm390, %v414, 0.0
        %v419 = vsel %vm390, %v415, 0.0
        %v420 = vadd.f32 %v418, %v419
        %421 = vadd.xlane.f32.xlu0 %v420
        %v422 = vpop.xlane.xlu0 %421
        %423 = vst [vmem:[%s290] sm:$0x1] %v411
        %424 = vst [vmem:[%s296] sm:$0x1] %v422
        %s425 = sand.u32 %s106, 1
        %s426 = scalar_lea.sflag [#allocation4], %s425
        %s427 = sand.u32 %s106, 1
        %s428 = smul.addr %s427, 2
        %s429 = scalar_lea.vmem [#allocation7], %s428
        %s430 = sand.u32 %s28, 1
        %s431 = scalar_lea.sflag [#allocation9], %s430
        %s432 = sand.u32 %s134, 1
        %s433 = scalar_lea.vmem [#allocation8], %s432
        %s434 = sand.u32 %s28, 1
        %s435 = scalar_lea.sflag [#allocation9], %s434
        %s436 = sand.u32 %s162, 1
        %s437 = scalar_lea.vmem [#allocation10], %s436
        // Predicated region
        $region37: #{tpu_custom_call.1} parent=27 // pred_check
          %p438 = pneg %p116
        $region38: #{tpu_custom_call.1} parent=27 // pred_check_branch
          %440 = sbr.rel (%p438) target = $region40
        $region39: #{tpu_custom_call.1} parent=27 // pred_region
          %s441 = smul.u32 2, %s33
          %443 = vsyncadd %s426, 0
          %s444 = smul.addr %s32, 2
          %s445 = sadd.s32 %s441, %s444
          %s446 = scalar_lea.hbm %s2, %s445
          %s448 = sshll.u32 %s429, 4
          %s449 = int_to_ptr.vmem [resolvable:$true] %s448
          %s450 = sshll.u32 %s446, 4
          %s451 = int_to_ptr.hbm [resolvable:$true] %s450
          %453 = dma.vmem_to_hbm [thread:$0]  %s449, 32, %s451, %s426
        $region40: #{tpu_custom_call.1} parent=27 // pred_fallthru
          _
        // Predicated region
        $region41: #{tpu_custom_call.1} parent=27 // pred_check
          %p454 = pneg %p144
        $region42: #{tpu_custom_call.1} parent=27 // pred_check_branch
          %456 = sbr.rel (%p454) target = $region44
        $region43: #{tpu_custom_call.1} parent=27 // pred_region
          %458 = vsyncadd %s431, 0
          %s459 = sadd.s32 %s33, %s32
          %s460 = scalar_lea.hbm %s3, %s459
          %s462 = sshll.u32 %s433, 4
          %s463 = int_to_ptr.vmem [resolvable:$true] %s462
          %s464 = sshll.u32 %s460, 4
          %s465 = int_to_ptr.hbm [resolvable:$true] %s464
          %467 = dma.vmem_to_hbm [thread:$0]  %s463, 16, %s465, %s431
        $region44: #{tpu_custom_call.1} parent=27 // pred_fallthru
          _
        // Predicated region
        $region45: #{tpu_custom_call.1} parent=27 // pred_check
          %p468 = pneg %p172
        $region46: #{tpu_custom_call.1} parent=27 // pred_check_branch
          %470 = sbr.rel (%p468) target = $region48
        $region47: #{tpu_custom_call.1} parent=27 // pred_region
          %472 = vsyncadd %s435, 0
          %s473 = sadd.s32 %s33, %s32
          %s474 = scalar_lea.hbm %s4, %s473
          %s476 = sshll.u32 %s437, 4
          %s477 = int_to_ptr.vmem [resolvable:$true] %s476
          %s478 = sshll.u32 %s474, 4
          %s479 = int_to_ptr.hbm [resolvable:$true] %s478
          %481 = dma.vmem_to_hbm [thread:$0]  %s477, 16, %s479, %s435
        $region48: #{tpu_custom_call.1} parent=27 // pred_fallthru
          _
      $region28: #{tpu_custom_call.1} parent=5 // pred_fallthru
        _
      %p482 = scmp.le.s32.totalorder 2, %s23
      // Predicated region
      $region49: #{tpu_custom_call.1} parent=5 // pred_check
        %p483 = pneg %p482
      $region50: #{tpu_custom_call.1} parent=5 // pred_check_branch
        %485 = sbr.rel (%p483) target = $region52
      $region51: #{tpu_custom_call.1} parent=5 // pred_region
        %s486 = ssub.s32 %s23, 2
        // Predicated region
        $region53: #{tpu_custom_call.1} parent=51 // pred_check
          %p487 = pneg %p122
        $region54: #{tpu_custom_call.1} parent=51 // pred_check_branch
          %489 = sbr.rel (%p487) target = $region56
        $region55: #{tpu_custom_call.1} parent=51 // pred_region
          %s490 = sand.u32 %s107, 1
          %s491 = scalar_lea.sflag [#allocation4], %s490
          %s492 = sand.u32 %s107, 1
          %s493 = smul.addr %s492, 2
          %s494 = scalar_lea.vmem [#allocation7], %s493
          %496 = dma.done %s491, 32
        $region56: #{tpu_custom_call.1} parent=51 // pred_fallthru
          _
        // Predicated region
        $region57: #{tpu_custom_call.1} parent=51 // pred_check
          %p497 = pneg %p150
        $region58: #{tpu_custom_call.1} parent=51 // pred_check_branch
          %499 = sbr.rel (%p497) target = $region60
        $region59: #{tpu_custom_call.1} parent=51 // pred_region
          %s500 = sand.u32 %s29, 1
          %s501 = scalar_lea.sflag [#allocation9], %s500
          %s502 = sand.u32 %s135, 1
          %s503 = scalar_lea.vmem [#allocation8], %s502
          %505 = dma.done %s501, 16
        $region60: #{tpu_custom_call.1} parent=51 // pred_fallthru
          _
        // Predicated region
        $region61: #{tpu_custom_call.1} parent=51 // pred_check
          %p506 = pneg %p178
        $region62: #{tpu_custom_call.1} parent=51 // pred_check_branch
          %508 = sbr.rel (%p506) target = $region64
        $region63: #{tpu_custom_call.1} parent=51 // pred_region
          %s509 = sand.u32 %s29, 1
          %s510 = scalar_lea.sflag [#allocation9], %s509
          %s511 = sand.u32 %s163, 1
          %s512 = scalar_lea.vmem [#allocation10], %s511
          %514 = dma.done %s510, 16
        $region64: #{tpu_custom_call.1} parent=51 // pred_fallthru
          _
      $region52: #{tpu_custom_call.1} parent=5 // pred_fallthru
        _
    $region6: #{tpu_custom_call.1} parent=1 // loop_footer
      %s27 = sadd.s32 1, %s23
    $region7: #{tpu_custom_call.1} parent=1 // loop_footer_branch
      %22 = sbr.rel target = $region3
    $region8: #{tpu_custom_call.1} parent=1 // loop_exit
      _
    %515 = vsyncpa [#allocation3], 1
    %s516 = scalar_lea.sflag [#allocation3], 1
    %517 = vsyncpa %s516, 1
    %518 = vsyncpa [#allocation6], 1
    %s519 = scalar_lea.sflag [#allocation6], 1
    %520 = vsyncpa %s519, 1
    %521 = vsyncpa [#allocation4], 1
    %s522 = scalar_lea.sflag [#allocation4], 1
    %523 = vsyncpa %s522, 1
    %524 = vsyncpa [#allocation9], 1
    %s525 = scalar_lea.sflag [#allocation9], 1
    %526 = vsyncpa %s525, 1

</llo_original>
